<compile_context>
chip_gen: v5e
topology: v5e:2x2
jax: 0.10.0
libtpu: 0.0.40
codegen_flags: <defaults>
</compile_context>

<pallas_src>
import functools

import jax
import jax.numpy as jnp
from jax.experimental import pallas as pl
from jax.experimental.pallas import tpu as pltpu


# ---------------------------------------------------------------------------
# Kernels
# ---------------------------------------------------------------------------

def _linear_resident_kernel(x_ref, w_ref, b_ref, o_ref):
    # x_ref: (TM, K), w_ref: (K, Hp) [pre-transposed], b_ref: (1, Hp) f32,
    # o_ref: (TM, Hp).  Plain MXU matmul, f32 accumulate, f32 bias, cast.
    acc = jnp.dot(x_ref[...], w_ref[...], preferred_element_type=jnp.float32)
    o_ref[...] = (acc + b_ref[...].astype(jnp.float32)).astype(o_ref.dtype)


def _linear_ktiled_kernel(x_ref, w_ref, b_ref, o_ref, acc_ref):
    # (M, K) grid: stream (TM, TK) x tiles and (TK, Hp) weight tiles into an
    # f32 VMEM accumulator; add bias + cast + store on the last K step.
    k = pl.program_id(1)

    @pl.when(k == 0)
    def _init():
        acc_ref[...] = jnp.zeros_like(acc_ref)

    acc_ref[...] += jnp.dot(x_ref[...], w_ref[...],
                            preferred_element_type=jnp.float32)

    @pl.when(k == pl.num_programs(1) - 1)
    def _finalize():
        o_ref[...] = (acc_ref[...] + b_ref[...].astype(jnp.float32)
                      ).astype(o_ref.dtype)


# ---------------------------------------------------------------------------
# Sizing helpers (generation-aware)
# ---------------------------------------------------------------------------

def _round_up(n, m):
    return ((n + m - 1) // m) * m


def _round_down(n, m):
    return (n // m) * m


def _physical_vmem_bytes():
    try:
        info = pltpu.get_tpu_info()
        for name in ("vmem_capacity_bytes", "vmem_size_bytes", "vmem_bytes"):
            v = getattr(info, name, None)
            if v:
                return int(v)
    except Exception:
        pass
    return 64 * 1024 * 1024  # conservative fallback: assume v7x-sized VMEM


def _vmem_budgets():
    """Returns (pipeline_budget, base_vmem_limit, physical_vmem) per chip gen."""
    phys = _physical_vmem_bytes()
    mib = 1024 * 1024
    if phys >= 96 * mib:        # v5e / v6e: 128 MiB physical VMEM -> big tiles
        return 80 * mib, 100 * mib, phys
    if phys >= 48 * mib:        # v7x: 64 MiB physical -> stay conservative
        return 26 * mib, 44 * mib, phys
    return int(phys * 0.45), int(phys * 0.75), phys   # small / unknown parts


def _choose_tiling(M, K, Hp, in_sz, w_sz, out_sz, budget):
    """Pick ('resident', tm, K) or ('ktiled', tm, tk) under the VMEM budget."""
    sub_m = {4: 8, 2: 16, 1: 32}.get(in_sz, 8)   # sublane packing multiple
    m_full = _round_up(max(M, 1), sub_m)
    bias_bytes = 2 * 8 * Hp * 4                  # (1,Hp) f32, sublane-padded, 2 bufs

    # ---- Option A: weight fully VMEM-resident, tile rows (M) only. ----------
    # Weight/bias index_maps are constant so they are fetched once, but their
    # buffers are still counted at 2x here (pipeline double buffering).
    # TODO(synk): single-buffer the grid-invariant weight/bias (pipeline_mode=
    # pl.Buffered(1)) once verified on the target jax build to halve this term.
    w_cost = 2 * K * Hp * w_sz                         # resident weight buffers
    per_row = 2 * K * in_sz + 2 * Hp * out_sz          # double-buffered x + out
    rows = ((budget - w_cost - bias_bytes) // per_row
            if budget > w_cost + bias_bytes else 0)
    tm_a = min(1024, _round_down(rows, sub_m), m_full)

    can_ktile = (K % 128 == 0) and (K > 128)
    if tm_a >= sub_m or not can_ktile:
        # TODO(synk): when the weight exceeds the budget and K % 128 != 0, add a
        # zero-padded-K (or Hp-tiled) streaming path instead of relying on a
        # raised vmem limit.
        return "resident", max(sub_m, tm_a), K, sub_m

    # ---- Option B: stream the weight over a K grid axis (f32 accumulator). --
    tm = min(512, m_full)
    while tm >= sub_m:
        fixed = 2 * tm * Hp * out_sz + tm * Hp * 4 + bias_bytes   # out + acc
        rem = budget - fixed
        if rem > 0:
            per_k = 2 * tm * in_sz + 2 * Hp * w_sz     # x + weight tiles per K col
            tk = _round_down(min(rem // per_k, K), 128)
            while tk >= 128 and K % tk != 0:
                tk -= 128                              # tk must evenly divide K
            if tk >= 128:
                return "ktiled", tm, tk, sub_m
        tm = _round_down(tm // 2, sub_m)
    return "ktiled", sub_m, 128, sub_m


# ---------------------------------------------------------------------------
# Pallas linear:  y = x2d @ weight.T + bias   (PyTorch nn.Linear semantics)
# ---------------------------------------------------------------------------

def _pallas_linear(x2d, weight, bias, *, out_dtype=None, force_tk=None):
    M, K = x2d.shape
    H, Kw = weight.shape
    assert K == Kw, f"feature mismatch: x has {K}, weight expects {Kw}"
    out_dtype = out_dtype or x2d.dtype
    in_sz = jnp.dtype(x2d.dtype).itemsize
    w_sz = jnp.dtype(weight.dtype).itemsize
    out_sz = jnp.dtype(out_dtype).itemsize

    # Lane-dense output: pad H up to a multiple of 128 and pre-transpose the
    # PyTorch (out, in) weight ONCE to (K, Hp) so the kernel is a plain
    # (M,K)x(K,N) MXU matmul.  Padding columns are zero -> sliced off below.
    # TODO(synk): cache the transposed/padded weight across calls that reuse it.
    Hp = _round_up(H, 128)
    w_t = weight.T                                     # (K, H)
    if Hp != H:
        w_t = jnp.pad(w_t, ((0, 0), (0, Hp - H)))
        bias = jnp.pad(bias, ((0, Hp - H),))
    bias2d = bias.reshape(1, Hp).astype(jnp.float32)

    budget, base_limit, phys = _vmem_budgets()
    mode, tm, tk, sub_m = _choose_tiling(M, K, Hp, in_sz, w_sz, out_sz, budget)
    if force_tk is not None and force_tk % 128 == 0 and K % force_tk == 0:
        mode, tk = "ktiled", force_tk                  # test hook / manual override

    # Keep >= 2 row tiles so v7x's two TensorCores both get work on the
    # "parallel" M axis (a 2-step sequential grid is negligible on v5e/v6e).
    if M >= 2 * sub_m:
        tm = min(tm, _round_up(pl.cdiv(M, 2), sub_m))
    if tm >= M:
        tm = M
    grid_m = pl.cdiv(M, tm)

    cost = pl.CostEstimate(
        flops=2 * M * K * Hp,
        transcendentals=0,
        bytes_accessed=M * K * in_sz + K * Hp * w_sz + M * Hp * out_sz + Hp * 4,
    )
    out_shape = jax.ShapeDtypeStruct((M, Hp), out_dtype)

    if mode == "resident":
        footprint = (2 * tm * K * in_sz + 2 * K * Hp * w_sz
                     + 2 * tm * Hp * out_sz + 2 * 8 * Hp * 4)
        vmem_limit = int(min(phys * 9 // 10,
                             max(base_limit, footprint + (2 << 20))))
        y = pl.pallas_call(
            _linear_resident_kernel,
            out_shape=out_shape,
            grid=(grid_m,),
            in_specs=[
                pl.BlockSpec((tm, K), lambda i: (i, 0)),   # streamed x row tiles
                pl.BlockSpec((K, Hp), lambda i: (0, 0)),   # weight: VMEM-resident
                pl.BlockSpec((1, Hp), lambda i: (0, 0)),   # bias:   VMEM-resident
            ],
            out_specs=pl.BlockSpec((tm, Hp), lambda i: (i, 0)),
            compiler_params=pltpu.CompilerParams(
                dimension_semantics=("parallel",),
                vmem_limit_bytes=vmem_limit),
            cost_estimate=cost,
        )(x2d, w_t, bias2d)
    else:
        grid_k = K // tk
        footprint = (2 * tm * tk * in_sz + 2 * tk * Hp * w_sz
                     + 2 * tm * Hp * out_sz + tm * Hp * 4 + 2 * 8 * Hp * 4)
        vmem_limit = int(min(phys * 9 // 10,
                             max(base_limit, footprint + (2 << 20))))
        y = pl.pallas_call(
            _linear_ktiled_kernel,
            out_shape=out_shape,
            grid=(grid_m, grid_k),                         # K (reduction) last
            in_specs=[
                pl.BlockSpec((tm, tk), lambda i, k: (i, k)),
                pl.BlockSpec((tk, Hp), lambda i, k: (k, 0)),
                pl.BlockSpec((1, Hp), lambda i, k: (0, 0)),
            ],
            out_specs=pl.BlockSpec((tm, Hp), lambda i, k: (i, 0)),
            scratch_shapes=[pltpu.VMEM((tm, Hp), jnp.float32)],
            compiler_params=pltpu.CompilerParams(
                dimension_semantics=("parallel", "arbitrary"),
                vmem_limit_bytes=vmem_limit),
            cost_estimate=cost,
        )(x2d, w_t, bias2d)

    if Hp != H:
        # Slice off lane padding; this typically fuses into the consumer.  For
        # very large outputs callers can keep the padded array instead.
        y = y[:, :H]
    return y


# ---------------------------------------------------------------------------
# TimeDistributed wrapper (forward-pass semantics of the PyTorch module)
# ---------------------------------------------------------------------------

def time_distributed_linear(x, weight, bias, axis, *,
                            compute_dtype=None, out_dtype=None, force_tk=None):
    """Equivalent of TimeDistributed(nn.Linear(in_f, out_f), axis).forward(x).

    weight: (out_features, in_features)  -- PyTorch nn.Linear layout (as stored).
    bias:   (out_features,)
    compute_dtype: optionally cast x/weight (e.g. jnp.bfloat16) for the MXU and
        halved HBM input traffic; accumulation stays f32 with an f32 bias add.
    out_dtype: optional override for the stored activation dtype (e.g. bf16
        stores halve output HBM traffic); defaults to x's original dtype.
    """
    out_dtype = out_dtype or x.dtype
    if compute_dtype is not None:
        x = x.astype(compute_dtype)
        weight = weight.astype(compute_dtype)
        # bias stays in its own (typically f32) dtype; added post-accumulate.
    # TODO(synk): optional fp8 compute_dtype path for v7x (fp8-native MXU).

    if x.ndim <= 2:
        x2d = x if x.ndim == 2 else x.reshape(1, -1)
        y = _pallas_linear(x2d, weight, bias, out_dtype=out_dtype,
                           force_tk=force_tk)
        return y if x.ndim == 2 else y.reshape(-1)

    # x_reshape = x.view(-1, *x.shape[axis:])
    lead_shape = x.shape[:axis]
    tail_shape = x.shape[axis:]
    x_reshape = x.reshape((-1,) + tail_shape)

    # The wrapped nn.Linear acts on the last dim; fold any extra tail dims into
    # the batch for the matmul (for axis == ndim-1 this is a no-op).
    M0 = x_reshape.shape[0]
    inner_extra = x_reshape.shape[1:-1]
    K = x_reshape.shape[-1]
    x2d = x_reshape.reshape(-1, K)

    y2d = _pallas_linear(x2d, weight, bias, out_dtype=out_dtype,
                         force_tk=force_tk)                 # (M0*extra, H)
    H = y2d.shape[-1]

    y = y2d.reshape((M0,) + inner_extra + (H,))             # module output shape
    # y = y.view(*x.shape[:axis], *y.shape[1:])
    y = y.reshape(lead_shape + y.shape[1:])
    return y


# ---------------------------------------------------------------------------
# Self-test
# ---------------------------------------------------------------------------

if __name__ == "__main__":
    key = jax.random.PRNGKey(0)
    k_x, k_w, k_b, k_x2, k_w2, k_b2 = jax.random.split(key, 6)

    # ---- Test 1: f32, resident-weight path, H not a multiple of 128. -------
    B, T, F, H = 2, 8, 32, 64
    x = jax.random.normal(k_x, (B, T, F), dtype=jnp.float32)
    weight = jax.random.normal(k_w, (H, F), dtype=jnp.float32) * 0.05  # (out, in)
    bias = jax.random.normal(k_b, (H,), dtype=jnp.float32) * 0.05

    td = jax.jit(functools.partial(time_distributed_linear, axis=2))
    y = jax.block_until_ready(td(x, weight, bias))
    y_ref = (x.reshape(-1, F) @ weight.T + bias).reshape(B, T, H)
    assert y.shape == (B, T, H)
    assert jnp.allclose(y, y_ref, atol=1e-5, rtol=1e-5)

    # ---- Test 2: bf16 compute (f32 accumulate + f32 bias), f32 output. -----
    td_bf16 = jax.jit(functools.partial(time_distributed_linear, axis=2,
                                        compute_dtype=jnp.bfloat16))
    y_bf16 = jax.block_until_ready(td_bf16(x, weight, bias))
    assert y_bf16.shape == (B, T, H) and y_bf16.dtype == x.dtype
    assert jnp.allclose(y_bf16, y_ref, atol=5e-2, rtol=5e-2)

    # ---- Test 3: K-tiled accumulator path (the large-weight / v7x path). ---
    F2, H2 = 256, 128
    x2 = jax.random.normal(k_x2, (B, T, F2), dtype=jnp.float32)
    w2 = jax.random.normal(k_w2, (H2, F2), dtype=jnp.float32) * 0.05
    b2 = jax.random.normal(k_b2, (H2,), dtype=jnp.float32) * 0.05
    td_kt = jax.jit(functools.partial(time_distributed_linear, axis=2,
                                      force_tk=128))
    y2 = jax.block_until_ready(td_kt(x2, w2, b2))
    y2_ref = (x2.reshape(-1, F2) @ w2.T + b2).reshape(B, T, H2)
    assert y2.shape == (B, T, H2)
    assert jnp.allclose(y2, y2_ref, atol=1e-4, rtol=1e-4)

    # ---- Test 4: axis=1 with an extra tail dim (TimeDistributed reshape). --
    x4 = jax.random.normal(k_x, (2, 3, 8, F), dtype=jnp.float32)
    td_ax1 = jax.jit(functools.partial(time_distributed_linear, axis=1))
    y4 = jax.block_until_ready(td_ax1(x4, weight, bias))
    y4_ref = (x4.reshape(-1, F) @ weight.T + bias).reshape(2, 3, 8, H)
    assert y4.shape == (2, 3, 8, H)
    assert jnp.allclose(y4, y4_ref, atol=1e-5, rtol=1e-5)

    # ---- Test 5: bf16 output override (halves output HBM traffic). ---------
    td_bf16_out = jax.jit(functools.partial(
        time_distributed_linear, axis=2,
        compute_dtype=jnp.bfloat16, out_dtype=jnp.bfloat16))
    y5 = jax.block_until_ready(td_bf16_out(x, weight, bias))
    assert y5.shape == (B, T, H) and y5.dtype == jnp.bfloat16

    print("KERNEL_OK")
</pallas_src>

<mosaic_0001>
module attributes {stable_mosaic.version = 11 : i64} {
  func.func @_linear_resident_kernel(%arg0: i32, %arg1: memref<8x32xf32, #tpu.memory_space<vmem>>, %arg2: memref<32x128xf32, #tpu.memory_space<vmem>>, %arg3: memref<1x128xf32, #tpu.memory_space<vmem>>, %arg4: memref<8x128xf32, #tpu.memory_space<vmem>>) attributes {dimension_semantics = [#tpu.dimension_semantics<parallel>], iteration_bounds = array<i64: 2>, scalar_prefetch = 0 : i64, scratch_operands = 0 : i64, tpu.core_type = #tpu.core_type<tc>, window_params = [{transform_indices = @transform_0, window_bounds = array<i64: 8, 32>}, {pipeline_mode = #tpu.pipeline_mode<synchronous>, transform_indices = @transform_1, window_bounds = array<i64: 32, 128>}, {pipeline_mode = #tpu.pipeline_mode<synchronous>, transform_indices = @transform_2, window_bounds = array<i64: 1, 128>}, {transform_indices = @transform_3, window_bounds = array<i64: 8, 128>}]} {
    %c0 = arith.constant 0 : index
    %c0_0 = arith.constant 0 : index
    %0 = vector.load %arg1[%c0, %c0_0] : memref<8x32xf32, #tpu.memory_space<vmem>>, vector<8x32xf32>
    %c0_1 = arith.constant 0 : index
    %c0_2 = arith.constant 0 : index
    %1 = vector.load %arg2[%c0_1, %c0_2] : memref<32x128xf32, #tpu.memory_space<vmem>>, vector<32x128xf32>
    %cst = arith.constant dense<0.000000e+00> : vector<8x128xf32>
    %2 = tpu.matmul %0, %1, %cst {dimension_numbers = #tpu.dot_dimension_numbers<[1], [0], [0], [1], [0, 0, 1, 1], [], []>} : vector<8x32xf32>, vector<32x128xf32>, vector<8x128xf32> -> vector<8x128xf32>
    %c0_3 = arith.constant 0 : index
    %c0_4 = arith.constant 0 : index
    %3 = vector.load %arg3[%c0_3, %c0_4] : memref<1x128xf32, #tpu.memory_space<vmem>>, vector<1x128xf32>
    %4 = vector.broadcast %3 : vector<1x128xf32> to vector<8x128xf32>
    %5 = arith.addf %2, %4 : vector<8x128xf32>
    %c0_5 = arith.constant 0 : index
    %c0_6 = arith.constant 0 : index
    %6 = vector.load %arg4[%c0_5, %c0_6] : memref<8x128xf32, #tpu.memory_space<vmem>>, vector<8x128xf32>
    tpu.vector_store %arg4[%c0_5, %c0_6], %5 {strides = array<i32>} : memref<8x128xf32, #tpu.memory_space<vmem>>, vector<8x128xf32>,
    return
  }
  func.func @transform_0(%arg0: i32) -> (i32, i32) {
    %c0_i32 = arith.constant 0 : i32
    %c0_i32_0 = arith.constant 0 : i32
    return %arg0, %c0_i32 : i32, i32
  }
  func.func @transform_1(%arg0: i32) -> (i32, i32) {
    %c0_i32 = arith.constant 0 : i32
    %c0_i32_0 = arith.constant 0 : i32
    %c0_i32_1 = arith.constant 0 : i32
    return %c0_i32, %c0_i32_0 : i32, i32
  }
  func.func @transform_2(%arg0: i32) -> (i32, i32) {
    %c0_i32 = arith.constant 0 : i32
    %c0_i32_0 = arith.constant 0 : i32
    %c0_i32_1 = arith.constant 0 : i32
    return %c0_i32, %c0_i32_0 : i32, i32
  }
  func.func @transform_3(%arg0: i32) -> (i32, i32) {
    %c0_i32 = arith.constant 0 : i32
    %c0_i32_0 = arith.constant 0 : i32
    return %arg0, %c0_i32 : i32, i32
  }
}

</mosaic_0001>

<llo_original>
// kernel: time_distributed_linear.1
$region0: #{time_distributed_linear.1}
  #allocation0 [shape = 'u32[]', space=smem, size = 0x4, offset = 0x4, fixed_abs, tag = 'smem constant byte address 0x4 - core index']
  #allocation1 [shape = 'u32[72,128]{1,0:T(1,128)}', space=vmem, size = 0x9000, scoped, tag = 'internal scratch']
  %s0 = inlined_call_operand.vmem [shape: f32[16,32], index: 0, kind: input, shape index: {}]
  %s1 = inlined_call_operand.vmem [shape: f32[32,128], index: 1, kind: input, shape index: {}]
  %s2 = inlined_call_operand.vmem [shape: f32[1,128], index: 2, kind: input, shape index: {}]
  %s3 = inlined_call_operand.vmem [shape: f32[16,128], index: 3, kind: output, shape index: {}]
  %s4 = sld [smem:[#allocation0]]
  $region45: #{time_distributed_linear.1} parent=0
    _
  %s6 = ssub.s32 1, %s4
  %s7 = scalar_select 0, %s6, %s4
  loop: start=0, step=1, limit=4
  $region2: #{time_distributed_linear.1} parent=0 // loop_pre_header
    _
  $region3: #{time_distributed_linear.1} parent=0 // loop_header
    %s9 = sphi 0, %s13
    %p10 = scmp.ge.s32.totalorder %s9, 4
    %s19 = sphi 0, %s21
    %s22 = sphi 0, %s19
    %s23 = sphi 0, %s22
    %s39 = sphi 0, %s23
    %s43 = sphi 0, %s43
    %s45 = sphi 0, %s43
    %s46 = sphi 0, %s45
    %s60 = sphi 0, %s46
    %s64 = sphi 0, %s64
    %s66 = sphi 0, %s64
    %s67 = sphi 0, %s66
    %s81 = sphi 0, %s67
    %s87 = sphi 0, %s89
    %s90 = sphi 0, %s87
    %s91 = sphi 0, %s90
    %s107 = sphi 0, %s91
  $region4: #{time_distributed_linear.1} parent=0 // loop_header_branch
    %12 = sbr.rel (%p10) target = $region8
  $region5: #{time_distributed_linear.1} parent=0 // loop_body
    %s14 = ssub.s32 %s9, 1
    %s15 = ssub.s32 %s9, 2
    %s16 = sadd.s32 %s9, 1
    %s17 = ssub.s32 %s9, %s16
    %p18 = scmp.eq.s32.totalorder %s17, 0
    %s20 = sadd.s32 %s19, 1
    %s21 = scalar_select %p18, %s19, %s20
    %p24 = pneg %p18
    %p25 = scmp.eq.s32.totalorder %s9, 1
    %p26 = por %p24, %p25
    %p27 = scmp.ne.s32.totalorder %s19, %s22
    %p28 = scmp.eq.s32.totalorder %s9, 0
    %p29 = por %p27, %p28
    %p30 = scmp.ne.s32.totalorder %s19, %s22
    %p31 = scmp.eq.s32.totalorder %s14, 1
    %p32 = por %p30, %p31
    %p33 = scmp.ne.s32.totalorder %s22, %s23
    %p34 = scmp.eq.s32.totalorder %s14, 0
    %p35 = por %p33, %p34
    %p36 = scmp.ne.s32.totalorder %s22, %s23
    %p37 = scmp.eq.s32.totalorder %s15, 1
    %p38 = por %p36, %p37
    %p40 = scmp.ne.s32.totalorder %s23, %s39
    %p41 = scmp.eq.s32.totalorder %s15, 0
    %p42 = por %p40, %p41
    %s44 = sadd.s32 %s43, 1
    %p47 = scmp.eq.s32.totalorder %s9, 1
    %p48 = scmp.ne.s32.totalorder %s43, %s45
    %p49 = scmp.eq.s32.totalorder %s9, 0
    %p50 = por %p48, %p49
    %p51 = scmp.ne.s32.totalorder %s43, %s45
    %p52 = scmp.eq.s32.totalorder %s14, 1
    %p53 = por %p51, %p52
    %p54 = scmp.ne.s32.totalorder %s45, %s46
    %p55 = scmp.eq.s32.totalorder %s14, 0
    %p56 = por %p54, %p55
    %p57 = scmp.ne.s32.totalorder %s45, %s46
    %p58 = scmp.eq.s32.totalorder %s15, 1
    %p59 = por %p57, %p58
    %p61 = scmp.ne.s32.totalorder %s46, %s60
    %p62 = scmp.eq.s32.totalorder %s15, 0
    %p63 = por %p61, %p62
    %s65 = sadd.s32 %s64, 1
    %p68 = scmp.eq.s32.totalorder %s9, 1
    %p69 = scmp.ne.s32.totalorder %s64, %s66
    %p70 = scmp.eq.s32.totalorder %s9, 0
    %p71 = por %p69, %p70
    %p72 = scmp.ne.s32.totalorder %s64, %s66
    %p73 = scmp.eq.s32.totalorder %s14, 1
    %p74 = por %p72, %p73
    %p75 = scmp.ne.s32.totalorder %s66, %s67
    %p76 = scmp.eq.s32.totalorder %s14, 0
    %p77 = por %p75, %p76
    %p78 = scmp.ne.s32.totalorder %s66, %s67
    %p79 = scmp.eq.s32.totalorder %s15, 1
    %p80 = por %p78, %p79
    %p82 = scmp.ne.s32.totalorder %s67, %s81
    %p83 = scmp.eq.s32.totalorder %s15, 0
    %p84 = por %p82, %p83
    %s85 = ssub.s32 %s9, %s16
    %p86 = scmp.eq.s32.totalorder %s85, 0
    %s88 = sadd.s32 %s87, 1
    %s89 = scalar_select %p86, %s87, %s88
    %p92 = pneg %p86
    %p93 = scmp.eq.s32.totalorder %s9, 1
    %p94 = por %p92, %p93
    %p95 = scmp.ne.s32.totalorder %s87, %s90
    %p96 = scmp.eq.s32.totalorder %s9, 0
    %p97 = por %p95, %p96
    %p98 = scmp.ne.s32.totalorder %s87, %s90
    %p99 = scmp.eq.s32.totalorder %s14, 1
    %p100 = por %p98, %p99
    %p101 = scmp.ne.s32.totalorder %s90, %s91
    %p102 = scmp.eq.s32.totalorder %s14, 0
    %p103 = por %p101, %p102
    %p104 = scmp.ne.s32.totalorder %s90, %s91
    %p105 = scmp.eq.s32.totalorder %s15, 1
    %p106 = por %p104, %p105
    %p108 = scmp.ne.s32.totalorder %s91, %s107
    %p109 = scmp.eq.s32.totalorder %s15, 0
    %p110 = por %p108, %p109
    %p111 = scmp.le.s32.totalorder 1, %s9
    %p112 = scmp.lt.s32.totalorder %s9, 3
    %p113 = pnand %p111, %p112
    %p114 = pneg %p113
    // Predicated region
    $region9: #{time_distributed_linear.1} parent=5 // pred_check
      _
    $region10: #{time_distributed_linear.1} parent=5 // pred_check_branch
      %116 = sbr.rel (%p113) target = $region12
    $region11: #{time_distributed_linear.1} parent=5 // pred_region
      %s117 = ssub.s32 %s9, 1
      // Predicated region
      $region13: #{time_distributed_linear.1} parent=11 // pred_check
        %p118 = pneg %p56
      $region14: #{time_distributed_linear.1} parent=11 // pred_check_branch
        %120 = sbr.rel (%p118) target = $region16
      $region15: #{time_distributed_linear.1} parent=11 // pred_region
        _
      $region16: #{time_distributed_linear.1} parent=11 // pred_fallthru
        _
      // Predicated region
      $region17: #{time_distributed_linear.1} parent=11 // pred_check
        %p121 = pneg %p77
      $region18: #{time_distributed_linear.1} parent=11 // pred_check_branch
        %123 = sbr.rel (%p121) target = $region20
      $region19: #{time_distributed_linear.1} parent=11 // pred_region
        _
      $region20: #{time_distributed_linear.1} parent=11 // pred_fallthru
        _
    $region12: #{time_distributed_linear.1} parent=5 // pred_fallthru
      _
    %p124 = scmp.lt.s32.totalorder %s9, 2
    // Predicated region
    $region21: #{time_distributed_linear.1} parent=5 // pred_check
      %p125 = pneg %p124
    $region22: #{time_distributed_linear.1} parent=5 // pred_check_branch
      %127 = sbr.rel (%p125) target = $region24
    $region23: #{time_distributed_linear.1} parent=5 // pred_region
      // Predicated region
      $region25: #{time_distributed_linear.1} parent=23 // pred_check
        %p128 = pneg %p29
      $region26: #{time_distributed_linear.1} parent=23 // pred_check_branch
        %130 = sbr.rel (%p128) target = $region28
      $region27: #{time_distributed_linear.1} parent=23 // pred_region
        %p131 = scmp.lt.s32.totalorder %s9, 1
        %s132 = scalar_select %p131, %s9, 1
        %s133 = smul.addr %s132, 8
        %s134 = scalar_lea.vmem %s0, %s133
      $region28: #{time_distributed_linear.1} parent=23 // pred_fallthru
        _
    $region24: #{time_distributed_linear.1} parent=5 // pred_fallthru
      _
    %p135 = scmp.le.s32.totalorder 1, %s9
    %p136 = scmp.lt.s32.totalorder %s9, 3
    %p137 = pnand %p135, %p136
    %p138 = pneg %p137
    // Predicated region
    $region29: #{time_distributed_linear.1} parent=5 // pred_check
      _
    $region30: #{time_distributed_linear.1} parent=5 // pred_check_branch
      %140 = sbr.rel (%p137) target = $region32
    $region31: #{time_distributed_linear.1} parent=5 // pred_region
      %s141 = ssub.s32 %s9, 1
      %p142 = scmp.lt.s32.totalorder %s14, 1
      %s143 = scalar_select %p142, %s14, 1
      %s144 = smul.addr %s143, 8
      %s145 = scalar_lea.vmem %s0, %s144
      %p146 = pneg %p35
      %p147 = pneg %p32
      %p148 = pneg %p56
      %p149 = pneg %p53
      %p150 = pneg %p77
      %p151 = pneg %p74
      %p152 = pneg %p103
      %p153 = pneg %p100
      %p154 = scmp.lt.s32.totalorder %s14, 1
      %s155 = scalar_select %p154, %s14, 1
      %s156 = smul.addr %s155, 8
      %s157 = scalar_lea.vmem %s3, %s156
      %p158 = scmp.lt.s32.totalorder %s14, 1
      %s159 = scalar_select %p158, %s14, 1
      %s160 = smul.addr %s159, 8
      %s161 = scalar_lea.vmem %s0, %s160
      %p162 = scmp.lt.s32.totalorder %s14, 1
      %s163 = scalar_select %p162, %s14, 1
      %s164 = smul.addr %s163, 8
      %s165 = scalar_lea.vmem %s3, %s164
      %v166 = vld [vmem:[%s161] sm:$0xff]
      %v167 = vld [vmem:[%s1] sm:$0xff]
      %v168 = vld [vmem:[%s1 + $0x8] sm:$0xff]
      %v169 = vld [vmem:[%s1 + $0x10] sm:$0xff]
      %v170 = vld [vmem:[%s1 + $0x18] sm:$0xff]
      %v171 = vld [vmem:[%s2] sm:$0x1]
      %v173 = vperm.slane %v171, 0
      %vm175 = vcmask 261120
      %v177 = vsel %vm175, %v166, 0
      %179 = vmatpush.msra.mxu0 0.0
      %180 = vmatpush.msra.mxu0 0.0
      %181 = vmatpush.msra.mxu0 0.0
      %182 = vmatpush.msra.mxu0 0.0
      %183 = vmatpush.msra.mxu0 0.0
      %184 = vmatpush.msra.mxu0 0.0
      %185 = vmatpush.msra.mxu0 0.0
      %186 = vmatpush.msra.mxu0 0.0
      %187 = vmatpush.msra.mxu0 0.0
      %188 = vmatpush.msra.mxu0 0.0
      %189 = vmatpush.msra.mxu0 0.0
      %190 = vmatpush.msra.mxu0 0.0
      %191 = vmatpush.msra.mxu0 %v170
      %192 = vmatpush.msra.mxu0 %v169
      %193 = vmatpush.msra.mxu0 %v168
      %194 = vmatpush.msra.mxu0 %v167
      %195 = vmatmul.f32.gmra.mxu0 %v177
      %v196 = vpop.f32.mrf.mxu0
      %v197 = vadd.f32 %v173, %v196
      %198 = vdwg.mxu0
      %199 = vst [vmem:[%s165] sm:$0xff] %v197
      %p200 = scmp.lt.s32.totalorder %s14, 1
      %s201 = scalar_select %p200, %s14, 1
      %s202 = smul.addr %s201, 8
      %s203 = scalar_lea.vmem %s3, %s202
      // Predicated region
      $region33: #{time_distributed_linear.1} parent=31 // pred_check
        %p204 = pneg %p100
      $region34: #{time_distributed_linear.1} parent=31 // pred_check_branch
        %206 = sbr.rel (%p204) target = $region36
      $region35: #{time_distributed_linear.1} parent=31 // pred_region
        _
      $region36: #{time_distributed_linear.1} parent=31 // pred_fallthru
        _
    $region32: #{time_distributed_linear.1} parent=5 // pred_fallthru
      _
    %p207 = scmp.le.s32.totalorder 2, %s9
    // Predicated region
    $region37: #{time_distributed_linear.1} parent=5 // pred_check
      %p208 = pneg %p207
    $region38: #{time_distributed_linear.1} parent=5 // pred_check_branch
      %210 = sbr.rel (%p208) target = $region40
    $region39: #{time_distributed_linear.1} parent=5 // pred_region
      %s211 = ssub.s32 %s9, 2
      // Predicated region
      $region41: #{time_distributed_linear.1} parent=39 // pred_check
        %p212 = pneg %p106
      $region42: #{time_distributed_linear.1} parent=39 // pred_check_branch
        %214 = sbr.rel (%p212) target = $region44
      $region43: #{time_distributed_linear.1} parent=39 // pred_region
        %p215 = scmp.lt.s32.totalorder %s15, 1
        %s216 = scalar_select %p215, %s15, 1
        %s217 = smul.addr %s216, 8
        %s218 = scalar_lea.vmem %s3, %s217
      $region44: #{time_distributed_linear.1} parent=39 // pred_fallthru
        _
    $region40: #{time_distributed_linear.1} parent=5 // pred_fallthru
      _
  $region6: #{time_distributed_linear.1} parent=0 // loop_footer
    %s13 = sadd.s32 1, %s9
  $region7: #{time_distributed_linear.1} parent=0 // loop_footer_branch
    %8 = sbr.rel target = $region3
  $region8: #{time_distributed_linear.1} parent=0 // loop_exit
    _

</llo_original>
